<compile_context>
chip_gen: v7x
topology: tpu7x:2x2x1
jax: 0.10.0
libtpu: 0.0.40
codegen_flags: <defaults>
</compile_context>

<pallas_src>
import jax
import jax.numpy as jnp
from jax.experimental import pallas as pl
from jax.experimental.pallas import tpu as pltpu

P_SHAPE = (20, 20)  # parameter / input shape from the module


def _mul_kernel(p_ref, x_ref, o_ref):
    # Whole-array elementwise multiply on the VPU (tile is VMEM-resident).
    o_ref[...] = p_ref[...] * x_ref[...]


@jax.jit
def task_forward(p, x):
    """Pallas equivalent of Task.forward: return p * x (elementwise)."""
    assert p.shape == P_SHAPE and x.shape == P_SHAPE
    return pl.pallas_call(
        _mul_kernel,
        out_shape=jax.ShapeDtypeStruct(P_SHAPE, p.dtype),
        # Gridless; block_shape omitted => the whole (20,20) array per ref,
        # which is legal (equals full dims) and avoids any index_map/grid
        # bookkeeping for a single-tile workload.
        in_specs=[
            pl.BlockSpec(memory_space=pltpu.MemorySpace.VMEM),
            pl.BlockSpec(memory_space=pltpu.MemorySpace.VMEM),
        ],
        out_specs=pl.BlockSpec(memory_space=pltpu.MemorySpace.VMEM),
    )(p, x)


if __name__ == "__main__":
    key = jax.random.PRNGKey(0)
    k_p, k_x = jax.random.split(key)

    # Deterministic stand-in for torch.manual_seed(0); torch.randn(20, 20).
    p = jax.random.normal(k_p, P_SHAPE, dtype=jnp.float32)
    x = jax.random.normal(k_x, P_SHAPE, dtype=jnp.float32)

    out = task_forward(p, x)
    jax.block_until_ready(out)

    # Correctness check against the pure-JAX reference.
    ref = p * x
    assert out.shape == P_SHAPE
    assert jnp.allclose(out, ref, atol=1e-6, rtol=1e-6)

    print("KERNEL_OK")
</pallas_src>

<mosaic_0001>
module attributes {stable_mosaic.version = 11 : i64} {
  func.func @_mul_kernel(%arg0: memref<20x20xf32, #tpu.memory_space<vmem>>, %arg1: memref<20x20xf32, #tpu.memory_space<vmem>>, %arg2: memref<20x20xf32, #tpu.memory_space<vmem>>) attributes {dimension_semantics = [], scalar_prefetch = 0 : i64, scratch_operands = 0 : i64, tpu.core_type = #tpu.core_type<tc>} {
    %c0 = arith.constant 0 : index
    %c0_0 = arith.constant 0 : index
    %0 = vector.load %arg0[%c0, %c0_0] : memref<20x20xf32, #tpu.memory_space<vmem>>, vector<20x20xf32>
    %c0_1 = arith.constant 0 : index
    %c0_2 = arith.constant 0 : index
    %1 = vector.load %arg1[%c0_1, %c0_2] : memref<20x20xf32, #tpu.memory_space<vmem>>, vector<20x20xf32>
    %2 = arith.mulf %0, %1 : vector<20x20xf32>
    %c0_3 = arith.constant 0 : index
    %c0_4 = arith.constant 0 : index
    %3 = vector.load %arg2[%c0_3, %c0_4] : memref<20x20xf32, #tpu.memory_space<vmem>>, vector<20x20xf32>
    tpu.vector_store %arg2[%c0_3, %c0_4], %2 {strides = array<i32>} : memref<20x20xf32, #tpu.memory_space<vmem>>, vector<20x20xf32>,
    return
  }
}

</mosaic_0001>

<llo_original>
// kernel: task_forward.1
$region0: #{task_forward.1}
  #allocation0 [shape = 'u32[]', space=smem, size = 0x4, offset = 0x4, fixed_abs, tag = 'smem constant byte address 0x4 - core index']
  #allocation1 [shape = 'u32[144,128]{1,0:T(1,128)}', space=vmem, size = 0x12000, scoped, tag = 'internal scratch']
  %s0 = inlined_call_operand.hbm [shape: f32[20,20], index: 0, kind: input, shape index: {}]
  %s1 = inlined_call_operand.hbm [shape: f32[20,20], index: 1, kind: input, shape index: {}]
  %s2 = inlined_call_operand.hbm [shape: f32[20,20], index: 2, kind: output, shape index: {}]
  %s3 = sld [smem:[#allocation0]]
  $region26: #{task_forward.1} parent=0
    _
  %s5 = ssub.s32 1, %s3
  %s6 = scalar_select 0, %s5, %s3
  $region1: #{task_forward.1} parent=0
    #allocation2 [shape = 'u8[12288]{0}', space=vmem, size = 0x3000, scoped, tag = 'input window, operand 0, single buffered']
    #allocation3 [shape = 's32[1]{0}', space=sflag, size = 0x4, scoped, tag = 'scoped memory for task_forward.1']
    #allocation4 [shape = 's32[1]{0}', space=sflag, size = 0x4, scoped, tag = 'scoped memory for task_forward.1']
    #allocation5 [shape = 'u8[12288]{0}', space=vmem, size = 0x3000, scoped, tag = 'input window, operand 1, single buffered']
    #allocation6 [shape = 's32[1]{0}', space=sflag, size = 0x4, scoped, tag = 'scoped memory for task_forward.1']
    #allocation7 [shape = 'u8[12288]{0}', space=vmem, size = 0x3000, scoped, tag = 'output window, operand 0, single buffered']
    %7 = vsyncpa [#allocation3], 0
    %8 = vsyncpa [#allocation6], 0
    %9 = vsyncpa [#allocation4], 0
    // Predicated region
    $region2: #{task_forward.1} parent=1 // pred_check
      _
    $region3: #{task_forward.1} parent=1 // pred_check_branch
      %11 = sbr.rel (0) target = $region5
    $region4: #{task_forward.1} parent=1 // pred_region
      %s13 = ssub.s32 384, 384
      %14 = vsyncadd [#allocation3], %s13
      %s15 = sshll.u32 [#allocation2], 4
      %s16 = int_to_ptr.vmem [resolvable:$true] %s15
      %21 = dma.hbm_to_vmem [thread:$0]  %s0, 384, %s16, [#allocation3], 128, 128, 8
    $region5: #{task_forward.1} parent=1 // pred_fallthru
      _
    // Predicated region
    $region6: #{task_forward.1} parent=1 // pred_check
      _
    $region7: #{task_forward.1} parent=1 // pred_check_branch
      %23 = sbr.rel (0) target = $region9
    $region8: #{task_forward.1} parent=1 // pred_region
      %s25 = ssub.s32 384, 384
      %26 = vsyncadd [#allocation6], %s25
      %s27 = sshll.u32 [#allocation5], 4
      %s28 = int_to_ptr.vmem [resolvable:$true] %s27
      %33 = dma.hbm_to_vmem [thread:$0]  %s1, 384, %s28, [#allocation6], 128, 128, 8
    $region9: #{task_forward.1} parent=1 // pred_fallthru
      _
    // Predicated region
    $region10: #{task_forward.1} parent=1 // pred_check
      _
    $region11: #{task_forward.1} parent=1 // pred_check_branch
      %35 = sbr.rel (0) target = $region13
    $region12: #{task_forward.1} parent=1 // pred_region
      %36 = dma.done [#allocation3], 384
    $region13: #{task_forward.1} parent=1 // pred_fallthru
      _
    // Predicated region
    $region14: #{task_forward.1} parent=1 // pred_check
      _
    $region15: #{task_forward.1} parent=1 // pred_check_branch
      %38 = sbr.rel (0) target = $region17
    $region16: #{task_forward.1} parent=1 // pred_region
      %39 = dma.done [#allocation6], 384
    $region17: #{task_forward.1} parent=1 // pred_fallthru
      _
    %v40 = vld [vmem:[#allocation2] sm:$0xff]
    %v41 = vld [vmem:[#allocation2 + $0x8] sm:$0xff]
    %v42 = vld [vmem:[#allocation2 + $0x10] sm:$0xf]
    %v43 = vld [vmem:[#allocation5] sm:$0xff]
    %v44 = vld [vmem:[#allocation5 + $0x8] sm:$0xff]
    %v45 = vld [vmem:[#allocation5 + $0x10] sm:$0xf]
    %v46 = vmul.f32 %v40, %v43
    %v47 = vmul.f32 %v41, %v44
    %v48 = vmul.f32 %v42, %v45
    %vm49 = vcmask 162816
    %50 = vst.msk [vmem:[#allocation7] sm:$0xff] %vm49, %v46
    %51 = vst.msk [vmem:[#allocation7 + $0x8] sm:$0xff] %vm49, %v47
    %vm52 = vcmask 158720
    %53 = vst.msk [vmem:[#allocation7 + $0x10] sm:$0xf] %vm52, %v48
    // Predicated region
    $region18: #{task_forward.1} parent=1 // pred_check
      _
    $region19: #{task_forward.1} parent=1 // pred_check_branch
      %55 = sbr.rel (0) target = $region21
    $region20: #{task_forward.1} parent=1 // pred_region
      %s57 = ssub.s32 384, 384
      %58 = vsyncadd [#allocation4], %s57
      %s59 = sshll.u32 [#allocation7], 4
      %s60 = int_to_ptr.vmem [resolvable:$true] %s59
      %65 = dma.vmem_to_hbm [thread:$0]  %s60, 384, %s2, [#allocation4], 128, 128, 8
    $region21: #{task_forward.1} parent=1 // pred_fallthru
      _
    // Predicated region
    $region22: #{task_forward.1} parent=1 // pred_check
      _
    $region23: #{task_forward.1} parent=1 // pred_check_branch
      %67 = sbr.rel (0) target = $region25
    $region24: #{task_forward.1} parent=1 // pred_region
      %68 = dma.done [#allocation4], 384
    $region25: #{task_forward.1} parent=1 // pred_fallthru
      _
    %69 = vsyncpa [#allocation3], 1
    %70 = vsyncpa [#allocation6], 1
    %71 = vsyncpa [#allocation4], 1

</llo_original>
